<compile_context>
chip_gen: v7x
topology: tpu7x:2x2x1
jax: 0.10.0
libtpu: 0.0.40
codegen_flags: <defaults>
</compile_context>

<pallas_src>
import jax
import jax.numpy as jnp
from jax.experimental import pallas as pl
from jax.experimental.pallas import tpu as pltpu


# ----------------------------------------------------------------------------
# Shared correlation + fuse epilogue (used by both the fused and modular kernels)
# ----------------------------------------------------------------------------
def _corr_and_fuse(fz, fx, o_ref, fuse_method, multiplier, feat_len_z):
    """fz: (C, Lz) f32, fx: (C, Lx) f32 (channels-first, one batch element).
    Writes the (Lz_out, Lx) correlation / softmax volume into o_ref."""
    if fuse_method in ('SINSOFTMAX', 'BISOFTMAX'):
        # Fold the softmax scale into the *small* operand, in f32, before the
        # bf16 cast (Lz*C mults instead of Lz*Lx).
        fz = fz * multiplier
    # vol[z, x] = sum_c fz[c, z] * fx[c, x]; transpose in f32 (XLU), matmul on MXU
    # with f32 accumulation.
    vol = jnp.dot(fz.T.astype(jnp.bfloat16), fx.astype(jnp.bfloat16),
                  preferred_element_type=jnp.float32)            # (Lz, Lx)
    if fuse_method == 'POINTWISE':
        o_ref[...] = vol
    elif fuse_method == 'SINSOFTMAX':
        # torch softmax(dim=2) == over the Lx axis
        e = jnp.exp(vol - jnp.max(vol, axis=1, keepdims=True))
        o_ref[...] = e * pl.reciprocal(jnp.sum(e, axis=1, keepdims=True), approx=True)
    elif fuse_method == 'BISOFTMAX':
        # Two independent numerically-stable softmaxes (per-axis maxes; the extra
        # exp is essentially free on the EUP at these sizes).
        e1 = jnp.exp(vol - jnp.max(vol, axis=0, keepdims=True))     # torch dim=1
        o_ref[:feat_len_z, :] = e1 * pl.reciprocal(
            jnp.sum(e1, axis=0, keepdims=True), approx=True)
        e2 = jnp.exp(vol - jnp.max(vol, axis=1, keepdims=True))     # torch dim=2
        o_ref[feat_len_z:, :] = e2 * pl.reciprocal(
            jnp.sum(e2, axis=1, keepdims=True), approx=True)
    else:
        # TODO(synk): ORIGIN / BISOFTMAX_ORIGIN are pure reshapes/concats of fx,
        # not kernel work; not implemented here.
        raise ValueError('Invalid fuse method')


# ----------------------------------------------------------------------------
# Fused kernel: bottleneck conv (both branches) + bias + pos add + corr + softmax
# ----------------------------------------------------------------------------
def _make_fused_kernel(fuse_method, multiplier, feat_len_z):
    def kernel(xz_ref, xx_ref, w_ref, b_ref, pz_ref, px_ref, o_ref):
        # xz: (Cb, Lz) f32   xx: (Cb, Lx) f32   w: (hid, Cb) f32   b: (hid, 1) f32
        # pz: (hid, Lz) f32  px: (hid, Lx) f32  o: (Lz_out, Lx) f32
        w = w_ref[...].astype(jnp.bfloat16)               # in-kernel cast (VPU, free)
        bias = b_ref[...]
        fz = jnp.dot(w, xz_ref[...].astype(jnp.bfloat16),
                     preferred_element_type=jnp.float32) + bias + pz_ref[...]
        fx = jnp.dot(w, xx_ref[...].astype(jnp.bfloat16),
                     preferred_element_type=jnp.float32) + bias + px_ref[...]
        _corr_and_fuse(fz, fx, o_ref, fuse_method, multiplier, feat_len_z)
    return kernel


def fused_backbone_corr(xz, xx, w, b, pz, px, fuse_method, multiplier):
    """Single pallas_call for the whole STARKSPLUS hot path.

    xz: (B, Cb, Lz) f32 raw template feats, xx: (B, Cb, Lx) f32 raw search feats,
    w: (hidden, Cb), b: (hidden,), pz: (B, hidden, Lz), px: (B, hidden, Lx).
    Returns the (B, Lz_out, Lx) f32 correlation / softmax volume.

    One batch element per grid step ("parallel") -> both v7x TensorCores are used
    when B >= 2; all intermediates live in VMEM."""
    B, Cb, Lz = xz.shape
    _, _, Lx = xx.shape
    hidden = w.shape[0]
    Lz_out = 2 * Lz if fuse_method == 'BISOFTMAX' else Lz
    return pl.pallas_call(
        _make_fused_kernel(fuse_method, multiplier, Lz),
        out_shape=jax.ShapeDtypeStruct((B, Lz_out, Lx), jnp.float32),
        grid=(B,),
        in_specs=[
            pl.BlockSpec((None, Cb, Lz), lambda i: (i, 0, 0)),
            pl.BlockSpec((None, Cb, Lx), lambda i: (i, 0, 0)),
            pl.BlockSpec((hidden, Cb), lambda i: (0, 0)),
            pl.BlockSpec((hidden, 1), lambda i: (0, 0)),
            pl.BlockSpec((None, hidden, Lz), lambda i: (i, 0, 0)),
            pl.BlockSpec((None, hidden, Lx), lambda i: (i, 0, 0)),
        ],
        out_specs=pl.BlockSpec((None, Lz_out, Lx), lambda i: (i, 0, 0)),
        compiler_params=pltpu.CompilerParams(dimension_semantics=("parallel",)),
    )(xz, xx, w, b.reshape(hidden, 1).astype(jnp.float32), pz, px)


# ----------------------------------------------------------------------------
# Modular kernels (mode='backbone' / mode='transformer' structural path)
# ----------------------------------------------------------------------------
def _conv1x1_kernel(x_ref, w_ref, b_ref, o_ref):
    # x: (Cin, T) f32   w: (Cout, Cin) f32   b: (Cout, 1) f32   o: (Cout, T) bf16
    acc = jnp.dot(w_ref[...].astype(jnp.bfloat16), x_ref[...].astype(jnp.bfloat16),
                  preferred_element_type=jnp.float32)
    o_ref[...] = (acc + b_ref[...]).astype(o_ref.dtype)    # f32 epilogue, bf16 store


def conv1x1_cf(x_bcl, w, b, *, tile_hw=16384, out_dtype=jnp.bfloat16):
    """Channels-first 1x1 conv as a tiled matmul: (B, Cin, L) -> (B, Cout, L).

    f32 inputs are cast to bf16 *inside* the kernel; output is bf16 (f32 accum).
    Lane tiles up to `tile_hw` wide, capped so a double-buffered input block stays
    well inside scoped VMEM on every generation (v5e 16 MiB default is tightest)."""
    B, Cin, L = x_bcl.shape
    Cout = w.shape[0]
    tile_hw = max(128, (tile_hw // 128) * 128)
    t_cap = max(128, ((4 * 1024 * 1024) // (Cin * 4)) // 128 * 128)
    t_budget = min(tile_hw, t_cap)
    # full-dim block if it fits, else a 128-multiple tile (the trailing partial
    # block reads OOB padding -- safe: every output column depends only on its
    # own input column).
    t = L if L <= t_budget else t_budget
    grid = (B, pl.cdiv(L, t))
    return pl.pallas_call(
        _conv1x1_kernel,
        out_shape=jax.ShapeDtypeStruct((B, Cout, L), out_dtype),
        grid=grid,
        in_specs=[
            pl.BlockSpec((None, Cin, t), lambda bi, ti: (bi, 0, ti)),
            pl.BlockSpec((Cout, Cin), lambda bi, ti: (0, 0)),
            pl.BlockSpec((Cout, 1), lambda bi, ti: (0, 0)),
        ],
        out_specs=pl.BlockSpec((None, Cout, t), lambda bi, ti: (bi, 0, ti)),
        compiler_params=pltpu.CompilerParams(
            dimension_semantics=("parallel", "parallel"),
            vmem_limit_bytes=32 * 1024 * 1024),
    )(x_bcl, w, b.reshape(Cout, 1).astype(jnp.float32))


def _make_corr_kernel(fuse_method, multiplier, feat_len_z):
    def kernel(fz_ref, fx_ref, o_ref):
        _corr_and_fuse(fz_ref[...].astype(jnp.float32),
                       fx_ref[...].astype(jnp.float32),
                       o_ref, fuse_method, multiplier, feat_len_z)
    return kernel


def corr_volume_cf(fz, fx, fuse_method, multiplier):
    """Channels-first correlation: fz (B, C, Lz), fx (B, C, Lx) -> (B, Lz_out, Lx)."""
    B, C, Lz = fz.shape
    _, _, Lx = fx.shape
    Lz_out = 2 * Lz if fuse_method == 'BISOFTMAX' else Lz
    return pl.pallas_call(
        _make_corr_kernel(fuse_method, multiplier, Lz),
        out_shape=jax.ShapeDtypeStruct((B, Lz_out, Lx), jnp.float32),
        grid=(B,),
        in_specs=[
            pl.BlockSpec((None, C, Lz), lambda i: (i, 0, 0)),
            pl.BlockSpec((None, C, Lx), lambda i: (i, 0, 0)),
        ],
        out_specs=pl.BlockSpec((None, Lz_out, Lx), lambda i: (i, 0, 0)),
        compiler_params=pltpu.CompilerParams(dimension_semantics=("parallel",)),
    )(fz, fx)


# ----------------------------------------------------------------------------
# Pure-JAX glue
# ----------------------------------------------------------------------------
def box_xyxy_to_cxcywh(x):
    x0, y0, x1, y1 = x[..., 0], x[..., 1], x[..., 2], x[..., 3]
    return jnp.stack([(x0 + x1) * 0.5, (y0 + y1) * 0.5, x1 - x0, y1 - y0], axis=-1)


class StarkSPlusPallas:
    """JAX/Pallas re-implementation of STARKSPLUS (head_type='CORNER')."""

    def __init__(self, key, backbone_channels=64, hidden_dim=32,
                 feat_sz_s=8, feat_sz_z=4, num_queries=1,
                 head_type='CORNER', fuse_method='POINTWISE'):
        self.head_type = head_type
        self.fuse_method = fuse_method
        self.num_queries = num_queries
        self.hidden_dim = hidden_dim
        self.multipler = 1.0 / (hidden_dim ** 0.5)
        self.feat_sz_s = feat_sz_s
        self.feat_len_s = feat_sz_s * feat_sz_s
        self.feat_sz_z = feat_sz_z
        self.feat_len_z = feat_sz_z * feat_sz_z

        k1, k2, k3, k4, k5 = jax.random.split(key, 5)
        # nn.Conv2d(backbone.num_channels, hidden_dim, kernel_size=1)
        self.bottleneck_w = (jax.random.normal(k1, (hidden_dim, backbone_channels),
                                               jnp.float32) * 0.05)
        self.bottleneck_b = (jax.random.normal(k2, (hidden_dim,), jnp.float32) * 0.05)
        # nn.Embedding(num_queries, hidden_dim) -- present but unused in this path
        self.query_embed = jax.random.normal(k3, (num_queries, hidden_dim), jnp.float32)
        # stand-in corner-predictor projection (real box_head is an external module)
        c_opt = 2 * self.feat_len_z if fuse_method == 'BISOFTMAX' else self.feat_len_z
        self.head_w = jax.random.normal(k4, (2, c_opt), jnp.float32) * 0.1
        self.head_b = jax.random.normal(k5, (2,), jnp.float32) * 0.1

    # ---- fused hot path: raw backbone feats -> correlation volume -> boxes -----
    def forward_fused(self, feat_z, mask_z, pos_z, feat_x, mask_x, pos_x):
        # TODO(synk): the ResNet backbone and transformer encoder are external
        # modules; the identity encoder (feat + pos) stands in for the transformer,
        # which is what lets backbone-adjust + encoder + correlation fuse into one
        # pallas_call.  Masks are carried for interface fidelity (unused here).
        del mask_z, mask_x
        B, Cb, Hz, Wz = feat_z.shape
        _, _, Hx, Wx = feat_x.shape
        xz = feat_z.reshape(B, Cb, Hz * Wz)                 # free NCHW reshapes
        xx = feat_x.reshape(B, Cb, Hx * Wx)
        pz = pos_z.reshape(B, self.hidden_dim, Hz * Wz)
        px = pos_x.reshape(B, self.hidden_dim, Hx * Wx)
        vol = fused_backbone_corr(xz, xx, self.bottleneck_w, self.bottleneck_b,
                                  pz, px, self.fuse_method, self.multipler)
        out, coord = self._finish_box_head(vol)
        return out, coord, None

    # ---- modular path mirroring the original mode='backbone' / 'transformer' ---
    def forward(self, img=None, seq_dict=None, mode='backbone',
                run_box_head=True, run_cls_head=False):
        if mode == 'backbone':
            src_feat, mask, pos = img
            return self.forward_backbone(src_feat, mask, pos)
        elif mode == 'transformer':
            return self.forward_transformer(seq_dict, run_box_head, run_cls_head)
        else:
            raise ValueError

    def forward_backbone(self, src_feat, mask, pos_embed):
        # TODO(synk): real ResNet backbone is an external module; this takes its
        # output feature map / mask / positional encoding directly.
        B, Cb, H, W = src_feat.shape
        L = H * W
        feat = conv1x1_cf(src_feat.reshape(B, Cb, L),
                          self.bottleneck_w, self.bottleneck_b)      # Pallas, bf16 out
        # channels-first (B, C, L): no (HW, B, C) permute round trips.
        return {'feat': feat,
                'mask': mask.reshape(B, L),
                'pos': pos_embed.reshape(B, self.hidden_dim, L)}

    def forward_transformer(self, seq_dict, run_box_head=True, run_cls_head=False):
        # TODO(synk): real transformer encoder is an external module; identity
        # encoder (feat + pos) used as a deterministic stand-in.
        enc_mem = seq_dict['feat'].astype(jnp.float32) + seq_dict['pos']  # (B, C, L)
        out, outputs_coord = self.forward_box_head(enc_mem)
        return out, outputs_coord, None

    def forward_box_head(self, memory):
        assert 'CORNER' in self.head_type
        # memory: (B, C, Lz + Lx) channels-first
        fz = memory[:, :, :-self.feat_len_s]
        fx = memory[:, :, -self.feat_len_s:]
        vol = corr_volume_cf(fz, fx, self.fuse_method, self.multipler)   # Pallas
        return self._finish_box_head(vol)

    def _finish_box_head(self, vol):
        B = vol.shape[0]
        opt_feat = vol.reshape(B, vol.shape[1], self.feat_sz_s, self.feat_sz_s)
        outputs_coord = box_xyxy_to_cxcywh(self._box_head(opt_feat))
        out = {'pred_boxes': outputs_coord}
        return out, outputs_coord

    def _box_head(self, opt_feat):
        # TODO(synk): real Corner_Predictor conv tower is an external module;
        # stand-in = 1x1 projection to 2 score maps + soft-argmax, in plain jnp
        # (a 2-lane Pallas output would be launch / masked-store dominated).
        B, _, fs, _ = opt_feat.shape
        score = (jnp.einsum('bchw,oc->bohw', opt_feat, self.head_w)
                 + self.head_b[None, :, None, None])
        prob = jax.nn.softmax(score.reshape(B, 2, fs * fs), axis=-1)
        coord = (jnp.arange(fs, dtype=jnp.float32) + 0.5) / fs
        xs = jnp.tile(coord, fs)            # x fastest along flattened HW
        ys = jnp.repeat(coord, fs)
        ex = jnp.sum(prob * xs, axis=-1)    # (B, 2)
        ey = jnp.sum(prob * ys, axis=-1)
        # map 0 -> top-left corner, map 1 -> bottom-right corner  (xyxy)
        return jnp.stack([ex[:, 0], ey[:, 0], ex[:, 1], ey[:, 1]], axis=-1)


# ----------------------------------------------------------------------------
if __name__ == "__main__":
    key = jax.random.PRNGKey(0)
    k_model, k_z, k_x, k_pz, k_px = jax.random.split(key, 5)

    B, C_BACK, HIDDEN = 2, 64, 32
    FEAT_SZ_Z, FEAT_SZ_S = 4, 8
    Lz, Lx = FEAT_SZ_Z * FEAT_SZ_Z, FEAT_SZ_S * FEAT_SZ_S

    model = StarkSPlusPallas(k_model, backbone_channels=C_BACK, hidden_dim=HIDDEN,
                             feat_sz_s=FEAT_SZ_S, feat_sz_z=FEAT_SZ_Z,
                             num_queries=1, fuse_method='POINTWISE')
    model_bi = StarkSPlusPallas(k_model, backbone_channels=C_BACK, hidden_dim=HIDDEN,
                                feat_sz_s=FEAT_SZ_S, feat_sz_z=FEAT_SZ_Z,
                                num_queries=1, fuse_method='BISOFTMAX')

    # synthetic backbone outputs (template z and search x)
    feat_z = jax.random.normal(k_z, (B, C_BACK, FEAT_SZ_Z, FEAT_SZ_Z), jnp.float32)
    feat_x = jax.random.normal(k_x, (B, C_BACK, FEAT_SZ_S, FEAT_SZ_S), jnp.float32)
    pos_z = jax.random.normal(k_pz, (B, HIDDEN, FEAT_SZ_Z, FEAT_SZ_Z), jnp.float32)
    pos_x = jax.random.normal(k_px, (B, HIDDEN, FEAT_SZ_S, FEAT_SZ_S), jnp.float32)
    mask_z = jnp.zeros((B, FEAT_SZ_Z, FEAT_SZ_Z), jnp.bool_)
    mask_x = jnp.zeros((B, FEAT_SZ_S, FEAT_SZ_S), jnp.bool_)

    # ---- fused hot path (single pallas_call) --------------------------------
    out_f, coord_f, _ = model.forward_fused(feat_z, mask_z, pos_z,
                                            feat_x, mask_x, pos_x)
    coord_f = jax.block_until_ready(coord_f)

    # ---- modular path (mode='backbone' x2 + merge + mode='transformer') -----
    dict_z = model.forward((feat_z, mask_z, pos_z), mode='backbone')
    dict_x = model.forward((feat_x, mask_x, pos_x), mode='backbone')
    seq_dict = {
        'feat': jnp.concatenate([dict_z['feat'], dict_x['feat']], axis=-1),
        'mask': jnp.concatenate([dict_z['mask'], dict_x['mask']], axis=-1),
        'pos': jnp.concatenate([dict_z['pos'], dict_x['pos']], axis=-1),
    }
    out_m, coord_m, _ = model.forward(seq_dict=seq_dict, mode='transformer')
    coord_m = jax.block_until_ready(coord_m)

    # ---- pure-JAX references (bf16 MXU operands, f32 accumulation) ----------
    def bf16(a):
        return a.astype(jnp.bfloat16).astype(jnp.float32)

    xz = feat_z.reshape(B, C_BACK, Lz)
    xx = feat_x.reshape(B, C_BACK, Lx)
    pz = pos_z.reshape(B, HIDDEN, Lz)
    px = pos_x.reshape(B, HIDDEN, Lx)
    wq = bf16(model.bottleneck_w)
    fz_ref = (jnp.einsum('oc,bcl->bol', wq, bf16(xz))
              + model.bottleneck_b[None, :, None] + pz)
    fx_ref = (jnp.einsum('oc,bcl->bol', wq, bf16(xx))
              + model.bottleneck_b[None, :, None] + px)
    vol_ref = jnp.einsum('bcz,bcx->bzx', bf16(fz_ref), bf16(fx_ref))   # POINTWISE

    # fused kernel volume (POINTWISE) vs reference
    vol_fused = fused_backbone_corr(xz, xx, model.bottleneck_w, model.bottleneck_b,
                                    pz, px, 'POINTWISE', model.multipler)
    assert jnp.allclose(vol_ref, vol_fused, atol=5e-2), "fused POINTWISE volume mismatch"

    # fused BISOFTMAX path vs reference softmaxes
    s_ref = vol_ref * model_bi.multipler
    ref_bi = jnp.concatenate([jax.nn.softmax(s_ref, axis=1),
                              jax.nn.softmax(s_ref, axis=2)], axis=1)
    vol_bi = fused_backbone_corr(xz, xx, model_bi.bottleneck_w, model_bi.bottleneck_b,
                                 pz, px, 'BISOFTMAX', model_bi.multipler)
    assert jnp.allclose(ref_bi, vol_bi, atol=2e-2), "fused BISOFTMAX mismatch"
    out_bi, coord_bi, _ = model_bi.forward_fused(feat_z, mask_z, pos_z,
                                                 feat_x, mask_x, pos_x)
    coord_bi = jax.block_until_ready(coord_bi)

    # modular path (bf16 bottleneck output) vs fused volume (loose tol: extra
    # bf16 rounding of the conv output before the pos add)
    enc = seq_dict['feat'].astype(jnp.float32) + seq_dict['pos']
    vol_mod = corr_volume_cf(enc[:, :, :-Lx], enc[:, :, -Lx:],
                             'POINTWISE', model.multipler)
    assert jnp.allclose(vol_fused, vol_mod, atol=0.25), "modular vs fused volume mismatch"

    assert coord_f.shape == (B, 4) and coord_m.shape == (B, 4) and coord_bi.shape == (B, 4)
    assert out_f['pred_boxes'].shape == (B, 4) and out_m['pred_boxes'].shape == (B, 4)
    assert jnp.allclose(coord_f, coord_m, atol=5e-2), "fused vs modular pred boxes mismatch"
    print("KERNEL_OK")
</pallas_src>

<mosaic_0001>
module attributes {stable_mosaic.version = 11 : i64} {
  func.func @kernel(%arg0: i32, %arg1: memref<1x64x16xf32, #tpu.memory_space<vmem>>, %arg2: memref<1x64x64xf32, #tpu.memory_space<vmem>>, %arg3: memref<32x64xf32, #tpu.memory_space<vmem>>, %arg4: memref<32x1xf32, #tpu.memory_space<vmem>>, %arg5: memref<1x32x16xf32, #tpu.memory_space<vmem>>, %arg6: memref<1x32x64xf32, #tpu.memory_space<vmem>>, %arg7: memref<1x16x64xf32, #tpu.memory_space<vmem>>) attributes {dimension_semantics = [#tpu.dimension_semantics<parallel>], iteration_bounds = array<i64: 2>, scalar_prefetch = 0 : i64, scratch_operands = 0 : i64, tpu.core_type = #tpu.core_type<tc>, window_params = [{transform_indices = @transform_0, window_bounds = array<i64: 1, 64, 16>}, {transform_indices = @transform_1, window_bounds = array<i64: 1, 64, 64>}, {pipeline_mode = #tpu.pipeline_mode<synchronous>, transform_indices = @transform_2, window_bounds = array<i64: 32, 64>}, {pipeline_mode = #tpu.pipeline_mode<synchronous>, transform_indices = @transform_3, window_bounds = array<i64: 32, 1>}, {transform_indices = @transform_4, window_bounds = array<i64: 1, 32, 16>}, {transform_indices = @transform_5, window_bounds = array<i64: 1, 32, 64>}, {transform_indices = @transform_6, window_bounds = array<i64: 1, 16, 64>}]} {
    %c0 = arith.constant 0 : index
    %c0_0 = arith.constant 0 : index
    %0 = vector.load %arg3[%c0, %c0_0] : memref<32x64xf32, #tpu.memory_space<vmem>>, vector<32x64xf32>
    %1 = arith.truncf %0 : vector<32x64xf32> to vector<32x64xbf16>
    %c0_1 = arith.constant 0 : index
    %c0_2 = arith.constant 0 : index
    %2 = vector.load %arg4[%c0_1, %c0_2] : memref<32x1xf32, #tpu.memory_space<vmem>>, vector<32x1xf32>
    %c0_3 = arith.constant 0 : index
    %c0_4 = arith.constant 0 : index
    %c0_5 = arith.constant 0 : index
    %3 = vector.load %arg1[%c0_3, %c0_4, %c0_5] : memref<1x64x16xf32, #tpu.memory_space<vmem>>, vector<1x64x16xf32>
    %4 = vector.shape_cast %3 : vector<1x64x16xf32> to vector<64x16xf32>
    %5 = arith.truncf %4 : vector<64x16xf32> to vector<64x16xbf16>
    %cst = arith.constant dense<0.000000e+00> : vector<32x16xf32>
    %6 = tpu.matmul %1, %5, %cst {dimension_numbers = #tpu.dot_dimension_numbers<[1], [0], [0], [1], [0, 0, 1, 1], [], []>} : vector<32x64xbf16>, vector<64x16xbf16>, vector<32x16xf32> -> vector<32x16xf32>
    %7 = vector.broadcast %2 : vector<32x1xf32> to vector<32x16xf32>
    %8 = arith.addf %6, %7 : vector<32x16xf32>
    %c0_6 = arith.constant 0 : index
    %c0_7 = arith.constant 0 : index
    %c0_8 = arith.constant 0 : index
    %9 = vector.load %arg5[%c0_6, %c0_7, %c0_8] : memref<1x32x16xf32, #tpu.memory_space<vmem>>, vector<1x32x16xf32>
    %10 = vector.shape_cast %9 : vector<1x32x16xf32> to vector<32x16xf32>
    %11 = arith.addf %8, %10 : vector<32x16xf32>
    %c0_9 = arith.constant 0 : index
    %c0_10 = arith.constant 0 : index
    %c0_11 = arith.constant 0 : index
    %12 = vector.load %arg2[%c0_9, %c0_10, %c0_11] : memref<1x64x64xf32, #tpu.memory_space<vmem>>, vector<1x64x64xf32>
    %13 = vector.shape_cast %12 : vector<1x64x64xf32> to vector<64x64xf32>
    %14 = arith.truncf %13 : vector<64x64xf32> to vector<64x64xbf16>
    %cst_12 = arith.constant dense<0.000000e+00> : vector<32x64xf32>
    %15 = tpu.matmul %1, %14, %cst_12 {dimension_numbers = #tpu.dot_dimension_numbers<[1], [0], [0], [1], [0, 0, 1, 1], [], []>} : vector<32x64xbf16>, vector<64x64xbf16>, vector<32x64xf32> -> vector<32x64xf32>
    %16 = vector.broadcast %2 : vector<32x1xf32> to vector<32x64xf32>
    %17 = arith.addf %15, %16 : vector<32x64xf32>
    %c0_13 = arith.constant 0 : index
    %c0_14 = arith.constant 0 : index
    %c0_15 = arith.constant 0 : index
    %18 = vector.load %arg6[%c0_13, %c0_14, %c0_15] : memref<1x32x64xf32, #tpu.memory_space<vmem>>, vector<1x32x64xf32>
    %19 = vector.shape_cast %18 : vector<1x32x64xf32> to vector<32x64xf32>
    %20 = arith.addf %17, %19 : vector<32x64xf32>
    %21 = tpu.transpose %11, [1, 0] : vector<32x16xf32> -> vector<16x32xf32>
    %22 = arith.truncf %21 : vector<16x32xf32> to vector<16x32xbf16>
    %23 = arith.truncf %20 : vector<32x64xf32> to vector<32x64xbf16>
    %cst_16 = arith.constant dense<0.000000e+00> : vector<16x64xf32>
    %24 = tpu.matmul %22, %23, %cst_16 {dimension_numbers = #tpu.dot_dimension_numbers<[1], [0], [0], [1], [0, 0, 1, 1], [], []>} : vector<16x32xbf16>, vector<32x64xbf16>, vector<16x64xf32> -> vector<16x64xf32>
    %c0_17 = arith.constant 0 : index
    %c0_18 = arith.constant 0 : index
    %c0_19 = arith.constant 0 : index
    %25 = vector.load %arg7[%c0_17, %c0_18, %c0_19] : memref<1x16x64xf32, #tpu.memory_space<vmem>>, vector<1x16x64xf32>
    %26 = vector.shape_cast %25 : vector<1x16x64xf32> to vector<16x64xf32>
    %27 = vector.shape_cast %24 : vector<16x64xf32> to vector<1x16x64xf32>
    tpu.vector_store %arg7[%c0_17, %c0_18, %c0_19], %27 {strides = array<i32>} : memref<1x16x64xf32, #tpu.memory_space<vmem>>, vector<1x16x64xf32>,
    return
  }
  func.func @transform_0(%arg0: i32) -> (i32, i32, i32) {
    %c0_i32 = arith.constant 0 : i32
    %c0_i32_0 = arith.constant 0 : i32
    %c0_i32_1 = arith.constant 0 : i32
    return %arg0, %c0_i32, %c0_i32_0 : i32, i32, i32
  }
  func.func @transform_1(%arg0: i32) -> (i32, i32, i32) {
    %c0_i32 = arith.constant 0 : i32
    %c0_i32_0 = arith.constant 0 : i32
    %c0_i32_1 = arith.constant 0 : i32
    return %arg0, %c0_i32, %c0_i32_0 : i32, i32, i32
  }
  func.func @transform_2(%arg0: i32) -> (i32, i32) {
    %c0_i32 = arith.constant 0 : i32
    %c0_i32_0 = arith.constant 0 : i32
    %c0_i32_1 = arith.constant 0 : i32
    return %c0_i32, %c0_i32_0 : i32, i32
  }
  func.func @transform_3(%arg0: i32) -> (i32, i32) {
    %c0_i32 = arith.constant 0 : i32
    %c0_i32_0 = arith.constant 0 : i32
    %c0_i32_1 = arith.constant 0 : i32
    return %c0_i32, %c0_i32_0 : i32, i32
  }
  func.func @transform_4(%arg0: i32) -> (i32, i32, i32) {
    %c0_i32 = arith.constant 0 : i32
    %c0_i32_0 = arith.constant 0 : i32
    %c0_i32_1 = arith.constant 0 : i32
    return %arg0, %c0_i32, %c0_i32_0 : i32, i32, i32
  }
  func.func @transform_5(%arg0: i32) -> (i32, i32, i32) {
    %c0_i32 = arith.constant 0 : i32
    %c0_i32_0 = arith.constant 0 : i32
    %c0_i32_1 = arith.constant 0 : i32
    return %arg0, %c0_i32, %c0_i32_0 : i32, i32, i32
  }
  func.func @transform_6(%arg0: i32) -> (i32, i32, i32) {
    %c0_i32 = arith.constant 0 : i32
    %c0_i32_0 = arith.constant 0 : i32
    %c0_i32_1 = arith.constant 0 : i32
    return %arg0, %c0_i32, %c0_i32_0 : i32, i32, i32
  }
}

</mosaic_0001>

<llo_original>
// kernel: tpu_custom_call.1
$region0: #{tpu_custom_call.1}
  #allocation0 [shape = 'u32[]', space=smem, size = 0x4, offset = 0x4, fixed_abs, tag = 'smem constant byte address 0x4 - core index']
  #allocation1 [shape = 'u32[144,128]{1,0:T(1,128)}', space=vmem, size = 0x12000, scoped, tag = 'internal scratch']
  %s0 = inlined_call_operand.vmem [shape: f32[2,64,16], index: 0, kind: input, shape index: {}]
  %s1 = inlined_call_operand.vmem [shape: f32[2,64,64], index: 1, kind: input, shape index: {}]
  %s2 = inlined_call_operand.vmem [shape: f32[32,64], index: 2, kind: input, shape index: {}]
  %s3 = inlined_call_operand.vmem [shape: f32[32,1], index: 3, kind: input, shape index: {}]
  %s4 = inlined_call_operand.vmem [shape: f32[2,32,16], index: 4, kind: input, shape index: {}]
  %s5 = inlined_call_operand.vmem [shape: f32[2,32,64], index: 5, kind: input, shape index: {}]
  %s6 = inlined_call_operand.hbm [shape: f32[2,16,64], index: 6, kind: output, shape index: {}]
  %s7 = sld [smem:[#allocation0]]
  $region57: #{tpu_custom_call.1} parent=0
    _
  %s9 = ssub.s32 1, %s7
  %s10 = scalar_select 0, %s9, %s7
  $region1: #{tpu_custom_call.1} parent=0
    #allocation2 [shape = 'u8[16384]{0}', space=vmem, size = 0x4000, scoped, tag = 'output window, operand 0']
    #allocation3 [shape = 's32[2]{0}', space=sflag, size = 0x8, scoped, tag = 'scoped memory for tpu_custom_call.1']
    %11 = vsyncpa [#allocation3], 0
    %s12 = scalar_lea.sflag [#allocation3], 1
    %13 = vsyncpa %s12, 0
    loop: start=0, step=1, limit=4
    $region2: #{tpu_custom_call.1} parent=1 // loop_pre_header
      _
    $region3: #{tpu_custom_call.1} parent=1 // loop_header
      %s15 = sphi 0, %s19
      %p16 = scmp.ge.s32.totalorder %s15, 4
      %s25 = sphi 0, %s27
      %s28 = sphi 0, %s25
      %s29 = sphi 0, %s28
      %s45 = sphi 0, %s29
      %s51 = sphi 0, %s53
      %s54 = sphi 0, %s51
      %s55 = sphi 0, %s54
      %s71 = sphi 0, %s55
      %s75 = sphi 0, %s75
      %s77 = sphi 0, %s75
      %s78 = sphi 0, %s77
      %s92 = sphi 0, %s78
      %s96 = sphi 0, %s96
      %s98 = sphi 0, %s96
      %s99 = sphi 0, %s98
      %s113 = sphi 0, %s99
      %s119 = sphi 0, %s121
      %s122 = sphi 0, %s119
      %s123 = sphi 0, %s122
      %s139 = sphi 0, %s123
      %s145 = sphi 0, %s147
      %s148 = sphi 0, %s145
      %s149 = sphi 0, %s148
      %s165 = sphi 0, %s149
      %s171 = sphi 0, %s173
      %s174 = sphi 0, %s171
      %s175 = sphi 0, %s174
      %s191 = sphi 0, %s175
    $region4: #{tpu_custom_call.1} parent=1 // loop_header_branch
      %18 = sbr.rel (%p16) target = $region8
    $region5: #{tpu_custom_call.1} parent=1 // loop_body
      %s20 = ssub.s32 %s15, 1
      %s21 = ssub.s32 %s15, 2
      %s22 = sadd.s32 %s15, 1
      %s23 = ssub.s32 %s15, %s22
      %p24 = scmp.eq.s32.totalorder %s23, 0
      %s26 = sadd.s32 %s25, 1
      %s27 = scalar_select %p24, %s25, %s26
      %p30 = pneg %p24
      %p31 = scmp.eq.s32.totalorder %s15, 1
      %p32 = por %p30, %p31
      %p33 = scmp.ne.s32.totalorder %s25, %s28
      %p34 = scmp.eq.s32.totalorder %s15, 0
      %p35 = por %p33, %p34
      %p36 = scmp.ne.s32.totalorder %s25, %s28
      %p37 = scmp.eq.s32.totalorder %s20, 1
      %p38 = por %p36, %p37
      %p39 = scmp.ne.s32.totalorder %s28, %s29
      %p40 = scmp.eq.s32.totalorder %s20, 0
      %p41 = por %p39, %p40
      %p42 = scmp.ne.s32.totalorder %s28, %s29
      %p43 = scmp.eq.s32.totalorder %s21, 1
      %p44 = por %p42, %p43
      %p46 = scmp.ne.s32.totalorder %s29, %s45
      %p47 = scmp.eq.s32.totalorder %s21, 0
      %p48 = por %p46, %p47
      %s49 = ssub.s32 %s15, %s22
      %p50 = scmp.eq.s32.totalorder %s49, 0
      %s52 = sadd.s32 %s51, 1
      %s53 = scalar_select %p50, %s51, %s52
      %p56 = pneg %p50
      %p57 = scmp.eq.s32.totalorder %s15, 1
      %p58 = por %p56, %p57
      %p59 = scmp.ne.s32.totalorder %s51, %s54
      %p60 = scmp.eq.s32.totalorder %s15, 0
      %p61 = por %p59, %p60
      %p62 = scmp.ne.s32.totalorder %s51, %s54
      %p63 = scmp.eq.s32.totalorder %s20, 1
      %p64 = por %p62, %p63
      %p65 = scmp.ne.s32.totalorder %s54, %s55
      %p66 = scmp.eq.s32.totalorder %s20, 0
      %p67 = por %p65, %p66
      %p68 = scmp.ne.s32.totalorder %s54, %s55
      %p69 = scmp.eq.s32.totalorder %s21, 1
      %p70 = por %p68, %p69
      %p72 = scmp.ne.s32.totalorder %s55, %s71
      %p73 = scmp.eq.s32.totalorder %s21, 0
      %p74 = por %p72, %p73
      %s76 = sadd.s32 %s75, 1
      %p79 = scmp.eq.s32.totalorder %s15, 1
      %p80 = scmp.ne.s32.totalorder %s75, %s77
      %p81 = scmp.eq.s32.totalorder %s15, 0
      %p82 = por %p80, %p81
      %p83 = scmp.ne.s32.totalorder %s75, %s77
      %p84 = scmp.eq.s32.totalorder %s20, 1
      %p85 = por %p83, %p84
      %p86 = scmp.ne.s32.totalorder %s77, %s78
      %p87 = scmp.eq.s32.totalorder %s20, 0
      %p88 = por %p86, %p87
      %p89 = scmp.ne.s32.totalorder %s77, %s78
      %p90 = scmp.eq.s32.totalorder %s21, 1
      %p91 = por %p89, %p90
      %p93 = scmp.ne.s32.totalorder %s78, %s92
      %p94 = scmp.eq.s32.totalorder %s21, 0
      %p95 = por %p93, %p94
      %s97 = sadd.s32 %s96, 1
      %p100 = scmp.eq.s32.totalorder %s15, 1
      %p101 = scmp.ne.s32.totalorder %s96, %s98
      %p102 = scmp.eq.s32.totalorder %s15, 0
      %p103 = por %p101, %p102
      %p104 = scmp.ne.s32.totalorder %s96, %s98
      %p105 = scmp.eq.s32.totalorder %s20, 1
      %p106 = por %p104, %p105
      %p107 = scmp.ne.s32.totalorder %s98, %s99
      %p108 = scmp.eq.s32.totalorder %s20, 0
      %p109 = por %p107, %p108
      %p110 = scmp.ne.s32.totalorder %s98, %s99
      %p111 = scmp.eq.s32.totalorder %s21, 1
      %p112 = por %p110, %p111
      %p114 = scmp.ne.s32.totalorder %s99, %s113
      %p115 = scmp.eq.s32.totalorder %s21, 0
      %p116 = por %p114, %p115
      %s117 = ssub.s32 %s15, %s22
      %p118 = scmp.eq.s32.totalorder %s117, 0
      %s120 = sadd.s32 %s119, 1
      %s121 = scalar_select %p118, %s119, %s120
      %p124 = pneg %p118
      %p125 = scmp.eq.s32.totalorder %s15, 1
      %p126 = por %p124, %p125
      %p127 = scmp.ne.s32.totalorder %s119, %s122
      %p128 = scmp.eq.s32.totalorder %s15, 0
      %p129 = por %p127, %p128
      %p130 = scmp.ne.s32.totalorder %s119, %s122
      %p131 = scmp.eq.s32.totalorder %s20, 1
      %p132 = por %p130, %p131
      %p133 = scmp.ne.s32.totalorder %s122, %s123
      %p134 = scmp.eq.s32.totalorder %s20, 0
      %p135 = por %p133, %p134
      %p136 = scmp.ne.s32.totalorder %s122, %s123
      %p137 = scmp.eq.s32.totalorder %s21, 1
      %p138 = por %p136, %p137
      %p140 = scmp.ne.s32.totalorder %s123, %s139
      %p141 = scmp.eq.s32.totalorder %s21, 0
      %p142 = por %p140, %p141
      %s143 = ssub.s32 %s15, %s22
      %p144 = scmp.eq.s32.totalorder %s143, 0
      %s146 = sadd.s32 %s145, 1
      %s147 = scalar_select %p144, %s145, %s146
      %p150 = pneg %p144
      %p151 = scmp.eq.s32.totalorder %s15, 1
      %p152 = por %p150, %p151
      %p153 = scmp.ne.s32.totalorder %s145, %s148
      %p154 = scmp.eq.s32.totalorder %s15, 0
      %p155 = por %p153, %p154
      %p156 = scmp.ne.s32.totalorder %s145, %s148
      %p157 = scmp.eq.s32.totalorder %s20, 1
      %p158 = por %p156, %p157
      %p159 = scmp.ne.s32.totalorder %s148, %s149
      %p160 = scmp.eq.s32.totalorder %s20, 0
      %p161 = por %p159, %p160
      %p162 = scmp.ne.s32.totalorder %s148, %s149
      %p163 = scmp.eq.s32.totalorder %s21, 1
      %p164 = por %p162, %p163
      %p166 = scmp.ne.s32.totalorder %s149, %s165
      %p167 = scmp.eq.s32.totalorder %s21, 0
      %p168 = por %p166, %p167
      %s169 = ssub.s32 %s15, %s22
      %p170 = scmp.eq.s32.totalorder %s169, 0
      %s172 = sadd.s32 %s171, 1
      %s173 = scalar_select %p170, %s171, %s172
      %p176 = pneg %p170
      %p177 = scmp.eq.s32.totalorder %s15, 1
      %p178 = por %p176, %p177
      %p179 = scmp.ne.s32.totalorder %s171, %s174
      %p180 = scmp.eq.s32.totalorder %s15, 0
      %p181 = por %p179, %p180
      %p182 = scmp.ne.s32.totalorder %s171, %s174
      %p183 = scmp.eq.s32.totalorder %s20, 1
      %p184 = por %p182, %p183
      %p185 = scmp.ne.s32.totalorder %s174, %s175
      %p186 = scmp.eq.s32.totalorder %s20, 0
      %p187 = por %p185, %p186
      %p188 = scmp.ne.s32.totalorder %s174, %s175
      %p189 = scmp.eq.s32.totalorder %s21, 1
      %p190 = por %p188, %p189
      %p192 = scmp.ne.s32.totalorder %s175, %s191
      %p193 = scmp.eq.s32.totalorder %s21, 0
      %p194 = por %p192, %p193
      %p195 = scmp.le.s32.totalorder 1, %s15
      %p196 = scmp.lt.s32.totalorder %s15, 3
      %p197 = pnand %p195, %p196
      %p198 = pneg %p197
      // Predicated region
      $region9: #{tpu_custom_call.1} parent=5 // pred_check
        _
      $region10: #{tpu_custom_call.1} parent=5 // pred_check_branch
        %200 = sbr.rel (%p197) target = $region12
      $region11: #{tpu_custom_call.1} parent=5 // pred_region
        %s201 = ssub.s32 %s15, 1
        // Predicated region
        $region13: #{tpu_custom_call.1} parent=11 // pred_check
          %p202 = pneg %p88
        $region14: #{tpu_custom_call.1} parent=11 // pred_check_branch
          %204 = sbr.rel (%p202) target = $region16
        $region15: #{tpu_custom_call.1} parent=11 // pred_region
          _
        $region16: #{tpu_custom_call.1} parent=11 // pred_fallthru
          _
        // Predicated region
        $region17: #{tpu_custom_call.1} parent=11 // pred_check
          %p205 = pneg %p109
        $region18: #{tpu_custom_call.1} parent=11 // pred_check_branch
          %207 = sbr.rel (%p205) target = $region20
        $region19: #{tpu_custom_call.1} parent=11 // pred_region
          _
        $region20: #{tpu_custom_call.1} parent=11 // pred_fallthru
          _
      $region12: #{tpu_custom_call.1} parent=5 // pred_fallthru
        _
      %p208 = scmp.lt.s32.totalorder %s15, 2
      // Predicated region
      $region21: #{tpu_custom_call.1} parent=5 // pred_check
        %p209 = pneg %p208
      $region22: #{tpu_custom_call.1} parent=5 // pred_check_branch
        %211 = sbr.rel (%p209) target = $region24
      $region23: #{tpu_custom_call.1} parent=5 // pred_region
        // Predicated region
        $region25: #{tpu_custom_call.1} parent=23 // pred_check
          %p212 = pneg %p35
        $region26: #{tpu_custom_call.1} parent=23 // pred_check_branch
          %214 = sbr.rel (%p212) target = $region28
        $region27: #{tpu_custom_call.1} parent=23 // pred_region
          %p215 = scmp.lt.s32.totalorder %s15, 1
          %s216 = scalar_select %p215, %s15, 1
          %s217 = smul.addr %s216, 8
          %s218 = smul.addr %s217, 8
          %s219 = scalar_lea.vmem %s0, %s218
        $region28: #{tpu_custom_call.1} parent=23 // pred_fallthru
          _
        // Predicated region
        $region29: #{tpu_custom_call.1} parent=23 // pred_check
          %p220 = pneg %p61
        $region30: #{tpu_custom_call.1} parent=23 // pred_check_branch
          %222 = sbr.rel (%p220) target = $region32
        $region31: #{tpu_custom_call.1} parent=23 // pred_region
          %p223 = scmp.lt.s32.totalorder %s15, 1
          %s224 = scalar_select %p223, %s15, 1
          %s225 = smul.addr %s224, 8
          %s226 = smul.addr %s225, 8
          %s227 = scalar_lea.vmem %s1, %s226
        $region32: #{tpu_custom_call.1} parent=23 // pred_fallthru
          _
        // Predicated region
        $region33: #{tpu_custom_call.1} parent=23 // pred_check
          %p228 = pneg %p129
        $region34: #{tpu_custom_call.1} parent=23 // pred_check_branch
          %230 = sbr.rel (%p228) target = $region36
        $region35: #{tpu_custom_call.1} parent=23 // pred_region
          %p231 = scmp.lt.s32.totalorder %s15, 1
          %s232 = scalar_select %p231, %s15, 1
          %s233 = smul.addr %s232, 4
          %s234 = smul.addr %s233, 8
          %s235 = scalar_lea.vmem %s4, %s234
        $region36: #{tpu_custom_call.1} parent=23 // pred_fallthru
          _
        // Predicated region
        $region37: #{tpu_custom_call.1} parent=23 // pred_check
          %p236 = pneg %p155
        $region38: #{tpu_custom_call.1} parent=23 // pred_check_branch
          %238 = sbr.rel (%p236) target = $region40
        $region39: #{tpu_custom_call.1} parent=23 // pred_region
          %p239 = scmp.lt.s32.totalorder %s15, 1
          %s240 = scalar_select %p239, %s15, 1
          %s241 = smul.addr %s240, 4
          %s242 = smul.addr %s241, 8
          %s243 = scalar_lea.vmem %s5, %s242
        $region40: #{tpu_custom_call.1} parent=23 // pred_fallthru
          _
      $region24: #{tpu_custom_call.1} parent=5 // pred_fallthru
        _
      %p244 = scmp.le.s32.totalorder 1, %s15
      %p245 = scmp.lt.s32.totalorder %s15, 3
      %p246 = pnand %p244, %p245
      %p247 = pneg %p246
      // Predicated region
      $region41: #{tpu_custom_call.1} parent=5 // pred_check
        _
      $region42: #{tpu_custom_call.1} parent=5 // pred_check_branch
        %249 = sbr.rel (%p246) target = $region44
      $region43: #{tpu_custom_call.1} parent=5 // pred_region
        %s250 = ssub.s32 %s15, 1
        %p251 = scmp.lt.s32.totalorder %s20, 1
        %s252 = scalar_select %p251, %s20, 1
        %s253 = smul.addr %s252, 8
        %s254 = smul.addr %s253, 8
        %s255 = scalar_lea.vmem %s0, %s254
        %p256 = pneg %p41
        %p257 = pneg %p38
        %p258 = scmp.lt.s32.totalorder %s20, 1
        %s259 = scalar_select %p258, %s20, 1
        %s260 = smul.addr %s259, 8
        %s261 = smul.addr %s260, 8
        %s262 = scalar_lea.vmem %s1, %s261
        %p263 = pneg %p67
        %p264 = pneg %p64
        %p265 = pneg %p88
        %p266 = pneg %p85
        %p267 = pneg %p109
        %p268 = pneg %p106
        %p269 = scmp.lt.s32.totalorder %s20, 1
        %s270 = scalar_select %p269, %s20, 1
        %s271 = smul.addr %s270, 4
        %s272 = smul.addr %s271, 8
        %s273 = scalar_lea.vmem %s4, %s272
        %p274 = pneg %p135
        %p275 = pneg %p132
        %p276 = scmp.lt.s32.totalorder %s20, 1
        %s277 = scalar_select %p276, %s20, 1
        %s278 = smul.addr %s277, 4
        %s279 = smul.addr %s278, 8
        %s280 = scalar_lea.vmem %s5, %s279
        %p281 = pneg %p161
        %p282 = pneg %p158
        %p283 = pneg %p187
        %p284 = pneg %p184
        %s285 = sand.u32 %s174, 1
        %s286 = scalar_lea.sflag [#allocation3], %s285
        %s287 = sand.u32 %s174, 1
        %s288 = smul.addr %s287, 16
        %s289 = scalar_lea.vmem [#allocation2], %s288
        %p290 = scmp.lt.s32.totalorder %s20, 1
        %s291 = scalar_select %p290, %s20, 1
        %s292 = smul.addr %s291, 8
        %s293 = smul.addr %s292, 8
        %s294 = scalar_lea.vmem %s0, %s293
        %p295 = scmp.lt.s32.totalorder %s20, 1
        %s296 = scalar_select %p295, %s20, 1
        %s297 = smul.addr %s296, 8
        %s298 = smul.addr %s297, 8
        %s299 = scalar_lea.vmem %s1, %s298
        %p300 = scmp.lt.s32.totalorder %s20, 1
        %s301 = scalar_select %p300, %s20, 1
        %s302 = smul.addr %s301, 4
        %s303 = smul.addr %s302, 8
        %s304 = scalar_lea.vmem %s4, %s303
        %p305 = scmp.lt.s32.totalorder %s20, 1
        %s306 = scalar_select %p305, %s20, 1
        %s307 = smul.addr %s306, 4
        %s308 = smul.addr %s307, 8
        %s309 = scalar_lea.vmem %s5, %s308
        %v311 = vld [vmem:[%s2] sm:$0xff]
        %v312 = vld [vmem:[%s2 + $0x8] sm:$0xff]
        %v313 = vld [vmem:[%s2 + $0x10] sm:$0xff]
        %v314 = vld [vmem:[%s2 + $0x18] sm:$0xff]
        %v315 = vpack.c.bf16 %v312, %v311
        %v316 = vpack.c.bf16 %v314, %v313
        %v317 = vld [vmem:[%s3] sm:$0xff]
        %v318 = vld [vmem:[%s3 + $0x8] sm:$0xff]
        %v319 = vld [vmem:[%s3 + $0x10] sm:$0xff]
        %v320 = vld [vmem:[%s3 + $0x18] sm:$0xff]
        %v321 = vld [vmem:[%s294] sm:$0xff]
        %v322 = vld [vmem:[%s294 + $0x8] sm:$0xff]
        %v323 = vld [vmem:[%s294 + $0x10] sm:$0xff]
        %v324 = vld [vmem:[%s294 + $0x18] sm:$0xff]
        %v325 = vld [vmem:[%s294 + $0x20] sm:$0xff]
        %v326 = vld [vmem:[%s294 + $0x28] sm:$0xff]
        %v327 = vld [vmem:[%s294 + $0x30] sm:$0xff]
        %v328 = vld [vmem:[%s294 + $0x38] sm:$0xff]
        %v329 = vpack.c.bf16 %v322, %v321
        %v330 = vpack.c.bf16 %v324, %v323
        %v331 = vpack.c.bf16 %v326, %v325
        %v332 = vpack.c.bf16 %v328, %v327
        %334 = vset.pattern.permute.xlu0 0
        %335 = vperm.xlu0 %334, %v317
        %v336 = vpop.permute.xlu0 %335
        %339 = vset.pattern.permute.xlu0 0
        %340 = vperm.xlu0 %339, %v318
        %v341 = vpop.permute.xlu0 %340
        %344 = vset.pattern.permute.xlu0 0
        %345 = vperm.xlu0 %344, %v319
        %v346 = vpop.permute.xlu0 %345
        %349 = vset.pattern.permute.xlu0 0
        %350 = vperm.xlu0 %349, %v320
        %v351 = vpop.permute.xlu0 %350
        %vm353 = vcmask 523264
        %v355 = vsel %vm353, %v315, 0
        %v358 = vsel %vm353, %v316, 0
        %360 = vmatprep.subr.bf16.mxu0 0
        %361 = vmatpush1.bf16.msra.mxu0 %v329
        %362 = vmatprep.subr.bf16.mxu0 0
        %363 = vmatpush1.bf16.msra.mxu0 %v330
        %364 = vmatprep.subr.bf16.mxu0 0
        %365 = vmatpush1.bf16.msra.mxu0 %v331
        %366 = vmatprep.subr.bf16.mxu0 0
        %367 = vmatpush1.bf16.msra.mxu0 %v332
        %368 = vmatprep.subr.bf16.mxu0 0
        %369 = vmatpush1.bf16.msra.mxu0 0
        %370 = vmatprep.subr.bf16.mxu0 0
        %371 = vmatpush1.bf16.msra.mxu0 0
        %372 = vmatprep.subr.bf16.mxu0 0
        %373 = vmatpush1.bf16.msra.mxu0 0
        %374 = vmatprep.subr.bf16.mxu0 0
        %375 = vmatpush1.bf16.msra.mxu0 0
        %376 = vmatprep.subr.bf16.mxu0 0
        %377 = vmatpush1.bf16.msra.mxu0 0
        %378 = vmatprep.subr.bf16.mxu0 0
        %379 = vmatpush1.bf16.msra.mxu0 0
        %380 = vmatprep.subr.bf16.mxu0 0
        %381 = vmatpush1.bf16.msra.mxu0 0
        %382 = vmatprep.subr.bf16.mxu0 0
        %383 = vmatpush1.bf16.msra.mxu0 0
        %384 = vmatprep.subr.bf16.mxu0 0
        %385 = vmatpush1.bf16.msra.mxu0 0
        %386 = vmatprep.subr.bf16.mxu0 0
        %387 = vmatpush1.bf16.msra.mxu0 0
        %388 = vmatprep.subr.bf16.mxu0 0
        %389 = vmatpush1.bf16.msra.mxu0 0
        %390 = vmatprep.subr.bf16.mxu0 0
        %391 = vmatpush1.bf16.msra.mxu0 0
        %392 = vmatprep.mubr.bf16.mxu0 0
        %393 = vmatmul.mubr.bf16.gmra.mrb[0].mxu0 %v355
        %v394 = vpop.f32.mrb[0].mxu0
        %v395 = vadd.f32 %v336, %v394
        %v396 = vpop.f32.mrb[0].mxu0
        %v397 = vpop.f32.mrb[0].mxu0
        %v398 = vadd.f32 %v341, %v397
        %v399 = vpop.f32.mrb[0].mxu0
        %400 = vmatprep.mubr.bf16.mxu0 0
        %401 = vmatmul.mubr.bf16.gmra.mrb[0].mxu0 %v358
        %v402 = vpop.f32.mrb[0].mxu0
        %v403 = vadd.f32 %v346, %v402
        %v404 = vpop.f32.mrb[0].mxu0
        %v405 = vpop.f32.mrb[0].mxu0
        %v406 = vadd.f32 %v351, %v405
        %v407 = vpop.f32.mrb[0].mxu0
        %408 = vdwg.mxu0
        %v409 = vld [vmem:[%s304] sm:$0xff]
        %v410 = vld [vmem:[%s304 + $0x8] sm:$0xff]
        %v411 = vld [vmem:[%s304 + $0x10] sm:$0xff]
        %v412 = vld [vmem:[%s304 + $0x18] sm:$0xff]
        %v413 = vadd.f32 %v395, %v409
        %v414 = vadd.f32 %v398, %v410
        %v415 = vadd.f32 %v403, %v411
        %v416 = vadd.f32 %v406, %v412
        %v417 = vld [vmem:[%s299] sm:$0xff]
        %v418 = vld [vmem:[%s299 + $0x8] sm:$0xff]
        %v419 = vld [vmem:[%s299 + $0x10] sm:$0xff]
        %v420 = vld [vmem:[%s299 + $0x18] sm:$0xff]
        %v421 = vld [vmem:[%s299 + $0x20] sm:$0xff]
        %v422 = vld [vmem:[%s299 + $0x28] sm:$0xff]
        %v423 = vld [vmem:[%s299 + $0x30] sm:$0xff]
        %v424 = vld [vmem:[%s299 + $0x38] sm:$0xff]
        %v425 = vpack.c.bf16 %v418, %v417
        %v426 = vpack.c.bf16 %v420, %v419
        %v427 = vpack.c.bf16 %v422, %v421
        %v428 = vpack.c.bf16 %v424, %v423
        %429 = vmatprep.subr.bf16.mxu0 0
        %430 = vmatpush1.bf16.msra.mxu0 %v425
        %431 = vmatprep.subr.bf16.mxu0 0
        %432 = vmatpush1.bf16.msra.mxu0 %v426
        %433 = vmatprep.subr.bf16.mxu0 0
        %434 = vmatpush1.bf16.msra.mxu0 %v427
        %435 = vmatprep.subr.bf16.mxu0 0
        %436 = vmatpush1.bf16.msra.mxu0 %v428
        %437 = vmatprep.subr.bf16.mxu0 0
        %438 = vmatpush1.bf16.msra.mxu0 0
        %439 = vmatprep.subr.bf16.mxu0 0
        %440 = vmatpush1.bf16.msra.mxu0 0
        %441 = vmatprep.subr.bf16.mxu0 0
        %442 = vmatpush1.bf16.msra.mxu0 0
        %443 = vmatprep.subr.bf16.mxu0 0
        %444 = vmatpush1.bf16.msra.mxu0 0
        %445 = vmatprep.subr.bf16.mxu0 0
        %446 = vmatpush1.bf16.msra.mxu0 0
        %447 = vmatprep.subr.bf16.mxu0 0
        %448 = vmatpush1.bf16.msra.mxu0 0
        %449 = vmatprep.subr.bf16.mxu0 0
        %450 = vmatpush1.bf16.msra.mxu0 0
        %451 = vmatprep.subr.bf16.mxu0 0
        %452 = vmatpush1.bf16.msra.mxu0 0
        %453 = vmatprep.subr.bf16.mxu0 0
        %454 = vmatpush1.bf16.msra.mxu0 0
        %455 = vmatprep.subr.bf16.mxu0 0
        %456 = vmatpush1.bf16.msra.mxu0 0
        %457 = vmatprep.subr.bf16.mxu0 0
        %458 = vmatpush1.bf16.msra.mxu0 0
        %459 = vmatprep.subr.bf16.mxu0 0
        %460 = vmatpush1.bf16.msra.mxu0 0
        %461 = vmatprep.mubr.bf16.mxu0 0
        %462 = vmatmul.mubr.bf16.gmra.mrb[0].mxu0 %v355
        %v463 = vpop.f32.mrb[0].mxu0
        %v464 = vadd.f32 %v336, %v463
        %v465 = vpop.f32.mrb[0].mxu0
        %v466 = vpop.f32.mrb[0].mxu0
        %v467 = vadd.f32 %v341, %v466
        %v468 = vpop.f32.mrb[0].mxu0
        %469 = vmatprep.mubr.bf16.mxu0 0
        %470 = vmatmul.mubr.bf16.gmra.mrb[0].mxu0 %v358
        %v471 = vpop.f32.mrb[0].mxu0
        %v472 = vadd.f32 %v346, %v471
        %v473 = vpop.f32.mrb[0].mxu0
        %v474 = vpop.f32.mrb[0].mxu0
        %v475 = vadd.f32 %v351, %v474
        %v476 = vpop.f32.mrb[0].mxu0
        %477 = vdwg.mxu0
        %v478 = vld [vmem:[%s309] sm:$0xff]
        %v479 = vld [vmem:[%s309 + $0x8] sm:$0xff]
        %v480 = vld [vmem:[%s309 + $0x10] sm:$0xff]
        %v481 = vld [vmem:[%s309 + $0x18] sm:$0xff]
        %v482 = vadd.f32 %v464, %v478
        %v483 = vadd.f32 %v467, %v479
        %v484 = vadd.f32 %v472, %v480
        %v485 = vadd.f32 %v475, %v481
        %486 = vxpose.xlu0.b32.start [1/16] %v413, 128
        %487 = vxpose.xlu0.b32.cont [2/16] %v414, 128
        %488 = vxpose.xlu0.b32.cont [3/16] %v415, 128
        %489 = vxpose.xlu0.b32.cont [4/16] %v416, 128
        %490 = vxpose.xlu0.b32.cont [5/16] 0.0, 128
        %491 = vxpose.xlu0.b32.cont [6/16] 0.0, 128
        %492 = vxpose.xlu0.b32.cont [7/16] 0.0, 128
        %493 = vxpose.xlu0.b32.cont [8/16] 0.0, 128
        %494 = vxpose.xlu0.b32.cont [9/16] 0.0, 128
        %495 = vxpose.xlu0.b32.cont [10/16] 0.0, 128
        %496 = vxpose.xlu0.b32.cont [11/16] 0.0, 128
        %497 = vxpose.xlu0.b32.cont [12/16] 0.0, 128
        %498 = vxpose.xlu0.b32.cont [13/16] 0.0, 128
        %499 = vxpose.xlu0.b32.cont [14/16] 0.0, 128
        %500 = vxpose.xlu0.b32.cont [15/16] 0.0, 128
        %501 = vxpose.xlu0.b32.end [16/16] 0.0, 128
        %v502 = vpop.trf.xlu0
        %v503 = vpop.trf.xlu0
        %v504 = vpop.trf.xlu0
        %v505 = vpop.trf.xlu0
        %v506 = vpop.trf.xlu0
        %v507 = vpop.trf.xlu0
        %v508 = vpop.trf.xlu0
        %v509 = vpop.trf.xlu0
        %v510 = vpop.trf.xlu0
        %v511 = vpop.trf.xlu0
        %v512 = vpop.trf.xlu0
        %v513 = vpop.trf.xlu0
        %v514 = vpop.trf.xlu0
        %v515 = vpop.trf.xlu0
        %v516 = vpop.trf.xlu0
        %v517 = vpop.trf.xlu0
        %v518 = vpack.c.bf16 %v503, %v502
        %v519 = vpack.c.bf16 %v483, %v482
        %v520 = vpack.c.bf16 %v485, %v484
        %vm521 = vcmask 261120
        %v523 = vsel %vm521, %v518, 0
        %525 = vmatprep.subr.bf16.mxu0 0
        %526 = vmatpush1.bf16.msra.mxu0 %v519
        %527 = vmatprep.subr.bf16.mxu0 0
        %528 = vmatpush1.bf16.msra.mxu0 %v520
        %529 = vmatprep.subr.bf16.mxu0 0
        %530 = vmatpush1.bf16.msra.mxu0 0
        %531 = vmatprep.subr.bf16.mxu0 0
        %532 = vmatpush1.bf16.msra.mxu0 0
        %533 = vmatprep.subr.bf16.mxu0 0
        %534 = vmatpush1.bf16.msra.mxu0 0
        %535 = vmatprep.subr.bf16.mxu0 0
        %536 = vmatpush1.bf16.msra.mxu0 0
        %537 = vmatprep.subr.bf16.mxu0 0
        %538 = vmatpush1.bf16.msra.mxu0 0
        %539 = vmatprep.subr.bf16.mxu0 0
        %540 = vmatpush1.bf16.msra.mxu0 0
        %541 = vmatprep.subr.bf16.mxu0 0
        %542 = vmatpush1.bf16.msra.mxu0 0
        %543 = vmatprep.subr.bf16.mxu0 0
        %544 = vmatpush1.bf16.msra.mxu0 0
        %545 = vmatprep.subr.bf16.mxu0 0
        %546 = vmatpush1.bf16.msra.mxu0 0
        %547 = vmatprep.subr.bf16.mxu0 0
        %548 = vmatpush1.bf16.msra.mxu0 0
        %549 = vmatprep.subr.bf16.mxu0 0
        %550 = vmatpush1.bf16.msra.mxu0 0
        %551 = vmatprep.subr.bf16.mxu0 0
        %552 = vmatpush1.bf16.msra.mxu0 0
        %553 = vmatprep.subr.bf16.mxu0 0
        %554 = vmatpush1.bf16.msra.mxu0 0
        %555 = vmatprep.subr.bf16.mxu0 0
        %556 = vmatpush1.bf16.msra.mxu0 0
        %557 = vmatprep.mubr.bf16.mxu0 0
        %558 = vmatmul.mubr.bf16.gmra.mrb[0].mxu0 %v523
        %v559 = vpop.f32.mrb[0].mxu0
        %v560 = vadd.f32 0.0, %v559
        %v561 = vpop.f32.mrb[0].mxu0
        %v562 = vpop.f32.mrb[0].mxu0
        %v563 = vadd.f32 0.0, %v562
        %v564 = vpop.f32.mrb[0].mxu0
        %565 = vdwg.mxu0
        %566 = vst.msk [vmem:[%s289] sm:$0xff] %vm353, %v560
        %567 = vst.msk [vmem:[%s289 + $0x8] sm:$0xff] %vm353, %v563
        %s568 = sand.u32 %s174, 1
        %s569 = scalar_lea.sflag [#allocation3], %s568
        %s570 = sand.u32 %s174, 1
        %s571 = smul.addr %s570, 16
        %s572 = scalar_lea.vmem [#allocation2], %s571
        // Predicated region
        $region45: #{tpu_custom_call.1} parent=43 // pred_check
          %p573 = pneg %p184
        $region46: #{tpu_custom_call.1} parent=43 // pred_check_branch
          %575 = sbr.rel (%p573) target = $region48
        $region47: #{tpu_custom_call.1} parent=43 // pred_region
          %s577 = ssub.s32 256, 256
          %578 = vsyncadd %s569, %s577
          %s579 = smul.addr %s20, 2
          %s580 = smul.addr %s579, 128
          %s581 = scalar_lea.hbm %s6, %s580
          %s582 = sshll.u32 %s572, 4
          %s583 = int_to_ptr.vmem [resolvable:$true] %s582
          %588 = dma.vmem_to_hbm [thread:$0]  %s583, 256, %s581, %s569, 128, 128, 8
        $region48: #{tpu_custom_call.1} parent=43 // pred_fallthru
          _
      $region44: #{tpu_custom_call.1} parent=5 // pred_fallthru
        _
      %p589 = scmp.le.s32.totalorder 2, %s15
      // Predicated region
      $region49: #{tpu_custom_call.1} parent=5 // pred_check
        %p590 = pneg %p589
      $region50: #{tpu_custom_call.1} parent=5 // pred_check_branch
        %592 = sbr.rel (%p590) target = $region52
      $region51: #{tpu_custom_call.1} parent=5 // pred_region
        %s593 = ssub.s32 %s15, 2
        // Predicated region
        $region53: #{tpu_custom_call.1} parent=51 // pred_check
          %p594 = pneg %p190
        $region54: #{tpu_custom_call.1} parent=51 // pred_check_branch
          %596 = sbr.rel (%p594) target = $region56
        $region55: #{tpu_custom_call.1} parent=51 // pred_region
          %s597 = sand.u32 %s175, 1
          %s598 = scalar_lea.sflag [#allocation3], %s597
          %s599 = sand.u32 %s175, 1
          %s600 = smul.addr %s599, 16
          %s601 = scalar_lea.vmem [#allocation2], %s600
          %602 = dma.done %s598, 256
        $region56: #{tpu_custom_call.1} parent=51 // pred_fallthru
          _
      $region52: #{tpu_custom_call.1} parent=5 // pred_fallthru
        _
    $region6: #{tpu_custom_call.1} parent=1 // loop_footer
      %s19 = sadd.s32 1, %s15
    $region7: #{tpu_custom_call.1} parent=1 // loop_footer_branch
      %14 = sbr.rel target = $region3
    $region8: #{tpu_custom_call.1} parent=1 // loop_exit
      _
    %603 = vsyncpa [#allocation3], 1
    %s604 = scalar_lea.sflag [#allocation3], 1
    %605 = vsyncpa %s604, 1

</llo_original>
